<compile_context>
chip_gen: v5e
topology: v5e:2x2
jax: 0.10.0
libtpu: 0.0.40
codegen_flags: <defaults>
</compile_context>

<pallas_src>
import functools

import jax
import jax.numpy as jnp
from jax.experimental import pallas as pl
from jax.experimental.pallas import tpu as pltpu


def _round_up(x, m):
    return (x + m - 1) // m * m


def linear_pooler_kernel(x_ref, w_ref, b_ref, o_ref):
    # x_ref: (TM, H_pad) bf16 first-token tile (resident across the N axis)
    # w_ref: (H_pad, TN) bf16, ALREADY transposed to (in, out) layout
    # b_ref: (1, TN)   f32 bias chunk
    # o_ref: (TM, TN)  output tile
    y = jnp.dot(x_ref[...], w_ref[...],
                preferred_element_type=jnp.float32)   # f32 accumulate on MXU
    y = y + b_ref[...]                                # VPU, free under DMA
    o_ref[...] = jnp.tanh(y).astype(o_ref.dtype)      # EUP, free under DMA


def prepare_linear_pooler_params(weight, bias):
    """One-time (init-time) weight prep.  weight: (H_out, H_in) torch layout.

    Returns (w_t, b2): w_t is (H_pad, H_pad) bf16 in (H_in, H_out) layout so the
    kernel needs no RHS transpose; b2 is (1, H_pad) f32.  Do NOT call this per
    forward pass -- cache the result next to the model params.
    """
    H = weight.shape[0]
    H_pad = _round_up(H, 128)
    w_t = weight.T.astype(jnp.bfloat16)               # (H_in, H_out)
    b = bias.astype(jnp.float32)
    if H_pad != H:
        w_t = jnp.pad(w_t, ((0, H_pad - H), (0, H_pad - H)))
        b = jnp.pad(b, (0, H_pad - H))
    return w_t, b.reshape(1, H_pad)


def linear_pooler_apply(hidden_states, w_t, b2, hidden_size, out_dtype=None):
    """hidden_states: (B, S, H); w_t/b2 from prepare_linear_pooler_params."""
    B = hidden_states.shape[0]
    H = hidden_size
    H_pad = w_t.shape[0]
    if out_dtype is None:
        out_dtype = hidden_states.dtype

    # Stage only token 0 (activation HBM traffic independent of S).
    first = hidden_states[:, 0, :].astype(jnp.bfloat16)     # (B, H)

    # Batch tile: scale up with B (per-step overhead amortization), 8-aligned.
    TM = min(512, _round_up(B, 8))
    B_pad = _round_up(B, TM)

    # Output-feature tile: largest of {512, 256, 128} dividing H_pad that still
    # gives >= 2 grid steps (so the weight DMA pipelines and both v7x TCs work).
    TN = H_pad
    for cand in (512, 256, 128):
        if H_pad % cand == 0 and H_pad // cand >= 2:
            TN = cand
            break

    if (B_pad, H_pad) != first.shape:
        first = jnp.pad(first, ((0, B_pad - B), (0, H_pad - H)))

    grid = (B_pad // TM, H_pad // TN)

    out_bytes = jnp.dtype(out_dtype).itemsize
    # Working set: double-buffered x / weight-chunk / bias-chunk / out tiles.
    est_vmem = (2 * TM * H_pad * 2          # x tiles, bf16
                + 2 * H_pad * TN * 2        # weight column chunks, bf16
                + 2 * TN * 4                # bias chunks, f32
                + 2 * TM * TN * out_bytes)  # out tiles
    # Cap at 48 MiB: leaves headroom on v7x's 64 MiB physical VMEM, harmless on
    # v5e/v6e (128 MiB).
    vmem_limit = int(min(max(2 * est_vmem, 16 * 1024 * 1024), 48 * 1024 * 1024))

    cost = pl.CostEstimate(
        flops=2 * B_pad * H_pad * H_pad,
        transcendentals=B_pad * H_pad,
        bytes_accessed=(B_pad * H_pad * 2 + H_pad * H_pad * 2
                        + H_pad * 4 + B_pad * H_pad * out_bytes))

    # NOTE: allow_input_fusion for the first-token slice/cast was considered but
    # skipped (modest win, keeps the call maximally portable across jax versions).
    out = pl.pallas_call(
        linear_pooler_kernel,
        out_shape=jax.ShapeDtypeStruct((B_pad, H_pad), out_dtype),
        grid=grid,
        in_specs=[
            pl.BlockSpec((TM, H_pad), lambda i, j: (i, 0)),   # x: resident in j
            pl.BlockSpec((H_pad, TN), lambda i, j: (0, j)),   # W.T column chunk
            pl.BlockSpec((1, TN), lambda i, j: (0, j)),       # bias chunk
        ],
        out_specs=pl.BlockSpec((TM, TN), lambda i, j: (i, j)),
        compiler_params=pltpu.CompilerParams(
            dimension_semantics=("parallel", "parallel"),
            vmem_limit_bytes=vmem_limit),
        cost_estimate=cost,
    )(first, w_t, b2)

    return out[:B, :H]


def linear_pooler(hidden_states, weight, bias):
    """Convenience one-shot wrapper (prep + apply).  In a real model, call
    prepare_linear_pooler_params once at init and reuse the result."""
    w_t, b2 = prepare_linear_pooler_params(weight, bias)
    return linear_pooler_apply(hidden_states, w_t, b2, weight.shape[0])


def reference(hidden_states, weight, bias):
    first = hidden_states[:, 0]
    return jnp.tanh(first @ weight.T + bias)


if __name__ == "__main__":
    B, S, H = 2, 8, 32
    key = jax.random.PRNGKey(0)
    k_x, k_w, k_b = jax.random.split(key, 3)

    hidden_states = jax.random.normal(k_x, (B, S, H), dtype=jnp.float32)
    # Deterministic init mimicking nn.Linear default: U(-1/sqrt(H), 1/sqrt(H))
    bound = 1.0 / (H ** 0.5)
    weight = jax.random.uniform(k_w, (H, H), minval=-bound, maxval=bound,
                                dtype=jnp.float32)
    bias = jax.random.uniform(k_b, (H,), minval=-bound, maxval=bound,
                              dtype=jnp.float32)

    # Hoisted (init-time) weight prep: cast + pad + transpose happen once.
    w_t, b2 = jax.block_until_ready(prepare_linear_pooler_params(weight, bias))

    apply_fn = jax.jit(functools.partial(linear_pooler_apply, hidden_size=H))
    out = jax.block_until_ready(apply_fn(hidden_states, w_t, b2))
    ref = reference(hidden_states, weight, bias)

    assert out.shape == (B, H)
    # bf16 matmul (f32 accumulate) vs. pure-f32 reference -> loose-ish tolerance.
    err = float(jnp.max(jnp.abs(out - ref)))
    assert jnp.allclose(out, ref, atol=2e-2, rtol=2e-2), f"max abs err {err}"

    print("KERNEL_OK")
</pallas_src>

<mosaic_0001>
module attributes {stable_mosaic.version = 11 : i64} {
  func.func @linear_pooler_kernel(%arg0: i32, %arg1: i32, %arg2: memref<8x128xbf16, #tpu.memory_space<vmem>>, %arg3: memref<128x128xbf16, #tpu.memory_space<vmem>>, %arg4: memref<1x128xf32, #tpu.memory_space<vmem>>, %arg5: memref<8x128xf32, #tpu.memory_space<vmem>>) attributes {dimension_semantics = [#tpu.dimension_semantics<parallel>, #tpu.dimension_semantics<parallel>], iteration_bounds = array<i64: 1, 1>, scalar_prefetch = 0 : i64, scratch_operands = 0 : i64, tpu.core_type = #tpu.core_type<tc>, window_params = [{transform_indices = @transform_0, window_bounds = array<i64: 8, 128>}, {transform_indices = @transform_1, window_bounds = array<i64: 128, 128>}, {transform_indices = @transform_2, window_bounds = array<i64: 1, 128>}, {transform_indices = @transform_3, window_bounds = array<i64: 8, 128>}]} {
    %c0 = arith.constant 0 : index
    %c0_0 = arith.constant 0 : index
    %0 = vector.load %arg2[%c0, %c0_0] : memref<8x128xbf16, #tpu.memory_space<vmem>>, vector<8x128xbf16>
    %c0_1 = arith.constant 0 : index
    %c0_2 = arith.constant 0 : index
    %1 = vector.load %arg3[%c0_1, %c0_2] : memref<128x128xbf16, #tpu.memory_space<vmem>>, vector<128x128xbf16>
    %cst = arith.constant dense<0.000000e+00> : vector<8x128xf32>
    %2 = tpu.matmul %0, %1, %cst {dimension_numbers = #tpu.dot_dimension_numbers<[1], [0], [0], [1], [0, 0, 1, 1], [], []>} : vector<8x128xbf16>, vector<128x128xbf16>, vector<8x128xf32> -> vector<8x128xf32>
    %c0_3 = arith.constant 0 : index
    %c0_4 = arith.constant 0 : index
    %3 = vector.load %arg4[%c0_3, %c0_4] : memref<1x128xf32, #tpu.memory_space<vmem>>, vector<1x128xf32>
    %4 = vector.broadcast %3 : vector<1x128xf32> to vector<8x128xf32>
    %5 = arith.addf %2, %4 : vector<8x128xf32>
    %6 = math.tanh %5 : vector<8x128xf32>
    %c0_5 = arith.constant 0 : index
    %c0_6 = arith.constant 0 : index
    %7 = vector.load %arg5[%c0_5, %c0_6] : memref<8x128xf32, #tpu.memory_space<vmem>>, vector<8x128xf32>
    tpu.vector_store %arg5[%c0_5, %c0_6], %6 {strides = array<i32>} : memref<8x128xf32, #tpu.memory_space<vmem>>, vector<8x128xf32>,
    return
  }
  func.func @transform_0(%arg0: i32, %arg1: i32) -> (i32, i32) {
    %c0_i32 = arith.constant 0 : i32
    %c0_i32_0 = arith.constant 0 : i32
    return %arg0, %c0_i32 : i32, i32
  }
  func.func @transform_1(%arg0: i32, %arg1: i32) -> (i32, i32) {
    %c0_i32 = arith.constant 0 : i32
    %c0_i32_0 = arith.constant 0 : i32
    return %c0_i32, %arg1 : i32, i32
  }
  func.func @transform_2(%arg0: i32, %arg1: i32) -> (i32, i32) {
    %c0_i32 = arith.constant 0 : i32
    %c0_i32_0 = arith.constant 0 : i32
    return %c0_i32, %arg1 : i32, i32
  }
  func.func @transform_3(%arg0: i32, %arg1: i32) -> (i32, i32) {
    %c0_i32 = arith.constant 0 : i32
    return %arg0, %arg1 : i32, i32
  }
}

</mosaic_0001>

<llo_original>
// kernel: linear_pooler_apply.1
$region0: #{linear_pooler_apply.1}
  #allocation0 [shape = 'u32[]', space=smem, size = 0x4, offset = 0x4, fixed_abs, tag = 'smem constant byte address 0x4 - core index']
  #allocation1 [shape = 'u32[72,128]{1,0:T(1,128)}', space=vmem, size = 0x9000, scoped, tag = 'internal scratch']
  %s0 = inlined_call_operand.vmem [shape: bf16[8,128], index: 0, kind: input, shape index: {}]
  %s1 = inlined_call_operand.hbm [shape: bf16[128,128], index: 1, kind: input, shape index: {}]
  %s2 = inlined_call_operand.vmem [shape: f32[1,128], index: 2, kind: input, shape index: {}]
  %s3 = inlined_call_operand.vmem [shape: f32[8,128], index: 3, kind: output, shape index: {}]
  %s4 = sld [smem:[#allocation0]]
  $region26: #{linear_pooler_apply.1} parent=0
    _
  %s6 = ssub.s32 1, %s4
  %s7 = scalar_select 0, %s6, %s4
  $region1: #{linear_pooler_apply.1} parent=0
    #allocation2 [shape = 'u8[32768]{0}', space=vmem, size = 0x8000, scoped, tag = 'input window, operand 1, single buffered']
    #allocation3 [shape = 's32[1]{0}', space=sflag, size = 0x4, scoped, tag = 'scoped memory for linear_pooler_apply.1']
    %8 = vsyncpa [#allocation3], 0
    // Predicated region
    $region2: #{linear_pooler_apply.1} parent=1 // pred_check
      _
    $region3: #{linear_pooler_apply.1} parent=1 // pred_check_branch
      %10 = sbr.rel (0) target = $region5
    $region4: #{linear_pooler_apply.1} parent=1 // pred_region
      _
    $region5: #{linear_pooler_apply.1} parent=1 // pred_fallthru
      _
    // Predicated region
    $region6: #{linear_pooler_apply.1} parent=1 // pred_check
      _
    $region7: #{linear_pooler_apply.1} parent=1 // pred_check_branch
      %12 = sbr.rel (0) target = $region9
    $region8: #{linear_pooler_apply.1} parent=1 // pred_region
      %14 = vsyncadd [#allocation3], 0
      %s15 = sshll.u32 %s1, 4
      %s16 = int_to_ptr.hbm [resolvable:$true] %s15
      %s17 = sshll.u32 [#allocation2], 4
      %s18 = int_to_ptr.vmem [resolvable:$true] %s17
      %23 = dma.hbm_to_vmem [thread:$0]  %s16, 1024, %s18, [#allocation3], 64, 64, 4
    $region9: #{linear_pooler_apply.1} parent=1 // pred_fallthru
      _
    // Predicated region
    $region10: #{linear_pooler_apply.1} parent=1 // pred_check
      _
    $region11: #{linear_pooler_apply.1} parent=1 // pred_check_branch
      %25 = sbr.rel (0) target = $region13
    $region12: #{linear_pooler_apply.1} parent=1 // pred_region
      _
    $region13: #{linear_pooler_apply.1} parent=1 // pred_fallthru
      _
    // Predicated region
    $region14: #{linear_pooler_apply.1} parent=1 // pred_check
      _
    $region15: #{linear_pooler_apply.1} parent=1 // pred_check_branch
      %27 = sbr.rel (0) target = $region17
    $region16: #{linear_pooler_apply.1} parent=1 // pred_region
      %29 = dma.done [#allocation3], 1024
    $region17: #{linear_pooler_apply.1} parent=1 // pred_fallthru
      _
    %v30 = vld [vmem:[%s0] sm:$0xf]
    %v31 = vld [vmem:[#allocation2] sm:$0xf]
    %v32 = vld [vmem:[#allocation2 + $0x4] sm:$0xf]
    %v33 = vld [vmem:[#allocation2 + $0x8] sm:$0xf]
    %v34 = vld [vmem:[#allocation2 + $0xc] sm:$0xf]
    %v35 = vld [vmem:[#allocation2 + $0x10] sm:$0xf]
    %v36 = vld [vmem:[#allocation2 + $0x14] sm:$0xf]
    %v37 = vld [vmem:[#allocation2 + $0x18] sm:$0xf]
    %v38 = vld [vmem:[#allocation2 + $0x1c] sm:$0xf]
    %v39 = vld [vmem:[#allocation2 + $0x20] sm:$0xf]
    %v40 = vld [vmem:[#allocation2 + $0x24] sm:$0xf]
    %v41 = vld [vmem:[#allocation2 + $0x28] sm:$0xf]
    %v42 = vld [vmem:[#allocation2 + $0x2c] sm:$0xf]
    %v43 = vld [vmem:[#allocation2 + $0x30] sm:$0xf]
    %v44 = vld [vmem:[#allocation2 + $0x34] sm:$0xf]
    %v45 = vld [vmem:[#allocation2 + $0x38] sm:$0xf]
    %v46 = vld [vmem:[#allocation2 + $0x3c] sm:$0xf]
    %v47 = vld [vmem:[%s2] sm:$0x1]
    %v49 = vperm.slane %v47, 0
    %v67 = vunpack.c.l.b16 %v31
    %v68 = vunpack.c.l.b16 %v32
    %v69 = vunpack.c.l.b16 %v33
    %v70 = vunpack.c.l.b16 %v34
    %v71 = vunpack.c.l.b16 %v35
    %v72 = vunpack.c.l.b16 %v36
    %v73 = vunpack.c.l.b16 %v37
    %v74 = vunpack.c.l.b16 %v38
    %v75 = vunpack.c.l.b16 %v39
    %v76 = vunpack.c.l.b16 %v40
    %v77 = vunpack.c.l.b16 %v41
    %v78 = vunpack.c.l.b16 %v42
    %v79 = vunpack.c.l.b16 %v43
    %v80 = vunpack.c.l.b16 %v44
    %v81 = vunpack.c.l.b16 %v45
    %v82 = vunpack.c.l.b16 %v46
    %v83 = vpack.c.b16 %v68, %v67
    %v84 = vpack.c.b16 %v70, %v69
    %v85 = vpack.c.b16 %v72, %v71
    %v86 = vpack.c.b16 %v74, %v73
    %v87 = vpack.c.b16 %v76, %v75
    %v88 = vpack.c.b16 %v78, %v77
    %v89 = vpack.c.b16 %v80, %v79
    %v90 = vpack.c.b16 %v82, %v81
    %99 = vmatpush.bf16.msra.mxu0 %v90
    %100 = vmatpush.bf16.msra.mxu0 %v89
    %101 = vmatpush.bf16.msra.mxu0 %v88
    %102 = vmatpush.bf16.msra.mxu0 %v87
    %103 = vmatpush.bf16.msra.mxu0 %v86
    %104 = vmatpush.bf16.msra.mxu0 %v85
    %105 = vmatpush.bf16.msra.mxu0 %v84
    %106 = vmatpush.bf16.msra.mxu0 %v83
    %107 = vmatmul.bf16.gmra.mxu0 %v30
    %v108 = vpop.f32.mrf.mxu0
    %v109 = vadd.f32 %v49, %v108
    %v110 = vpop.f32.mrf.mxu0
    %111 = vdwg.mxu0
    %v112 = vtanh.pop %v109
    %113 = vst [vmem:[%s3] sm:$0xff] %v112
    // Predicated region
    $region18: #{linear_pooler_apply.1} parent=1 // pred_check
      _
    $region19: #{linear_pooler_apply.1} parent=1 // pred_check_branch
      %115 = sbr.rel (0) target = $region21
    $region20: #{linear_pooler_apply.1} parent=1 // pred_region
      _
    $region21: #{linear_pooler_apply.1} parent=1 // pred_fallthru
      _
    // Predicated region
    $region22: #{linear_pooler_apply.1} parent=1 // pred_check
      _
    $region23: #{linear_pooler_apply.1} parent=1 // pred_check_branch
      %117 = sbr.rel (0) target = $region25
    $region24: #{linear_pooler_apply.1} parent=1 // pred_region
      _
    $region25: #{linear_pooler_apply.1} parent=1 // pred_fallthru
      _
    %118 = vsyncpa [#allocation3], 1

</llo_original>
